<compile_context>
chip_gen: v6e
topology: v6e:2x2x1
jax: 0.10.0
libtpu: 0.0.40
codegen_flags: <defaults>
</compile_context>

<pallas_src>
import jax
import jax.numpy as jnp
from jax.experimental import pallas as pl
from jax.experimental.pallas import tpu as pltpu

_LANES = 128


def channel_gate_kernel(x_ref, w1t_ref, b1_ref, w2t_ref, b2_ref, o_ref):
    """Fused ChannelGate for a block of B batch samples.

    x_ref  : (B, C, HW)  input feature maps, spatial flattened (lane-dense)
    w1t_ref: (C, Ch)     first Linear weight, pre-transposed (Ch = C // r)
    b1_ref : (1, Ch)     first Linear bias (row vector)
    w2t_ref: (Ch, C)     second Linear weight, pre-transposed
    b2_ref : (1, C)      second Linear bias (row vector)
    o_ref  : (B, C, HW)  gated output
    """
    B, C, HW = x_ref.shape

    # ---- Pooling: bulk on the VPU (elementwise accumulate over 128-lane
    # chunks, f32 accumulation), one cross-lane XLU reduce per row at the end.
    if HW % _LANES == 0 and HW > _LANES:
        n_chunks = HW // _LANES
        psum = x_ref[:, :, 0:_LANES].astype(jnp.float32)
        pmax = psum
        for k in range(1, n_chunks):
            chunk = x_ref[:, :, k * _LANES:(k + 1) * _LANES].astype(jnp.float32)
            psum = psum + chunk
            pmax = jnp.maximum(pmax, chunk)
        avg = jnp.sum(psum, axis=-1) * jnp.float32(1.0 / HW)       # (B, C)
        mx = jnp.max(pmax, axis=-1)                                # (B, C)
    else:
        xf = x_ref[...].astype(jnp.float32)
        avg = jnp.sum(xf, axis=-1) * jnp.float32(1.0 / HW)
        mx = jnp.max(xf, axis=-1)

    # ---- Shared MLP on both pooled vectors with ONE dot per layer:
    # MLP(avg)+MLP(mx) = (relu(avg@W1^T+b1)+relu(mx@W1^T+b1)) @ W2^T + 2*b2.
    p = jnp.concatenate([avg, mx], axis=0)                         # (2B, C)
    w1t = w1t_ref[...]                                             # (C, Ch)
    b1 = b1_ref[...]                                               # (1, Ch)
    w2t = w2t_ref[...]                                             # (Ch, C)
    b2 = b2_ref[...]                                               # (1, C)

    h = jnp.maximum(
        jnp.dot(p, w1t, preferred_element_type=jnp.float32) + b1, 0.0)  # (2B, Ch)
    hs = h[:B, :] + h[B:, :]                                       # (B, Ch)
    att = jnp.dot(hs, w2t, preferred_element_type=jnp.float32) + 2.0 * b2  # (B, C)
    scale = jax.nn.sigmoid(att)                                    # (B, C)

    # ---- Gate: multiply & store in the input dtype (bf16 stays bf16),
    # broadcasting the per-channel gate across the lane-dense spatial axis.
    x = x_ref[...]
    o_ref[...] = (x * scale.astype(x.dtype)[:, :, None]).astype(o_ref.dtype)


def _pick_block_batch(N, C, HW, elt_bytes, vmem_budget_bytes=16 * 1024 * 1024):
    """Largest per-step batch block B such that double-buffered in+out slabs
    fit a conservative VMEM budget (v7x: 64 MiB phys / 32 MiB default scoped)
    while keeping >= 2 grid steps when N >= 2 (feed both v7x TensorCores)."""
    per_sample = C * HW * elt_bytes
    max_b = max(1, vmem_budget_bytes // (4 * per_sample))  # 2x(in+out) buffers
    best = 1
    for b in range(1, N + 1):
        if N % b != 0 or b > max_b:
            continue
        steps = N // b
        if steps >= 2 or N == 1:
            best = max(best, b)
    return best


def channel_gate_forward(x_nchw, w1, b1, w2, b2):
    """ChannelGate forward. PyTorch layouts: w1:(Ch,C), b1:(Ch,), w2:(C,Ch), b2:(C,)."""
    N, C, H, W = x_nchw.shape
    Ch = w1.shape[0]
    assert w1.shape == (Ch, C) and w2.shape == (C, Ch)
    assert b1.shape == (Ch,) and b2.shape == (C,)
    HW = H * W

    # Free reshape: NCHW memory order preserved; no HBM round-trip added.
    x2 = x_nchw.reshape(N, C, HW)
    elt = jnp.dtype(x_nchw.dtype).itemsize
    B = _pick_block_batch(N, C, HW, elt)
    steps = N // B

    # Pre-transpose tiny MLP params into (in, out) row-vector layouts.
    w1t = jnp.asarray(w1, jnp.float32).T            # (C, Ch)
    w2t = jnp.asarray(w2, jnp.float32).T            # (Ch, C)
    b1r = jnp.asarray(b1, jnp.float32).reshape(1, Ch)
    b2r = jnp.asarray(b2, jnp.float32).reshape(1, C)

    param_bytes = 4 * (w1t.size + w2t.size + b1r.size + b2r.size)
    cost = pl.CostEstimate(
        flops=3 * N * C * HW + 8 * N * C * Ch,      # pool sum+max + gate mul + MLP
        transcendentals=N * C,                      # sigmoid
        bytes_accessed=2 * N * C * HW * elt + steps * param_bytes,
    )

    out = pl.pallas_call(
        channel_gate_kernel,
        out_shape=jax.ShapeDtypeStruct((N, C, HW), x_nchw.dtype),
        grid_spec=pl.GridSpec(
            grid=(steps,),
            in_specs=[
                pl.BlockSpec((B, C, HW), lambda n: (n, 0, 0)),  # per-step slab
                pl.BlockSpec((C, Ch), lambda n: (0, 0)),        # MLP weight 1^T
                pl.BlockSpec((1, Ch), lambda n: (0, 0)),        # MLP bias 1
                pl.BlockSpec((Ch, C), lambda n: (0, 0)),        # MLP weight 2^T
                pl.BlockSpec((1, C), lambda n: (0, 0)),         # MLP bias 2
            ],
            out_specs=pl.BlockSpec((B, C, HW), lambda n: (n, 0, 0)),
        ),
        compiler_params=pltpu.CompilerParams(
            dimension_semantics=("parallel",),
        ),
        cost_estimate=cost,
    )(x2, w1t, b1r, w2t, b2r)

    return out.reshape(N, C, H, W)


def _reference_forward(x, w1, b1, w2, b2):
    N, C, H, W = x.shape
    flat = x.reshape(N, C, H * W)
    avg = jnp.mean(flat, axis=-1)   # (N, C)
    mx = jnp.max(flat, axis=-1)     # (N, C)

    def mlp(p):
        h = jnp.maximum(
            jnp.dot(p, w1.T, precision=jax.lax.Precision.HIGHEST) + b1, 0.0)
        return jnp.dot(h, w2.T, precision=jax.lax.Precision.HIGHEST) + b2

    att = mlp(avg) + mlp(mx)                       # (N, C)
    scale = jax.nn.sigmoid(att)[:, :, None, None]  # (N, C, 1, 1)
    return x * scale


if __name__ == "__main__":
    # ChannelGate(gate_channels=32, reduction_ratio=16, pool_types=['avg','max'])
    N, C, H, W = 2, 32, 16, 16
    reduction = 16
    Ch = C // reduction  # hidden width of the MLP

    key = jax.random.PRNGKey(0)
    kx, k1, k2, k3, k4 = jax.random.split(key, 5)

    x = jax.random.normal(kx, (N, C, H, W), dtype=jnp.float32)

    # Deterministic Linear params (PyTorch layout: weight is (out, in)).
    w1 = jax.random.normal(k1, (Ch, C), dtype=jnp.float32) * (1.0 / C) ** 0.5
    b1 = jax.random.normal(k2, (Ch,), dtype=jnp.float32) * 0.1
    w2 = jax.random.normal(k3, (C, Ch), dtype=jnp.float32) * (1.0 / max(Ch, 1)) ** 0.5
    b2 = jax.random.normal(k4, (C,), dtype=jnp.float32) * 0.1

    y = channel_gate_forward(x, w1, b1, w2, b2)
    y = jax.block_until_ready(y)

    y_ref = _reference_forward(x, w1, b1, w2, b2)
    assert y.shape == (N, C, H, W), y.shape
    assert jnp.allclose(y, y_ref, rtol=1e-3, atol=1e-3), float(
        jnp.max(jnp.abs(y - y_ref))
    )

    print("KERNEL_OK")
</pallas_src>

<mosaic_0001>
module attributes {stable_mosaic.version = 11 : i64} {
  func.func @channel_gate_kernel(%arg0: i32, %arg1: memref<1x32x256xf32, #tpu.memory_space<vmem>>, %arg2: memref<32x2xf32, #tpu.memory_space<vmem>>, %arg3: memref<1x2xf32, #tpu.memory_space<vmem>>, %arg4: memref<2x32xf32, #tpu.memory_space<vmem>>, %arg5: memref<1x32xf32, #tpu.memory_space<vmem>>, %arg6: memref<1x32x256xf32, #tpu.memory_space<vmem>>) attributes {dimension_semantics = [#tpu.dimension_semantics<parallel>], iteration_bounds = array<i64: 2>, scalar_prefetch = 0 : i64, scratch_operands = 0 : i64, tpu.core_type = #tpu.core_type<tc>, window_params = [{transform_indices = @transform_0, window_bounds = array<i64: 1, 32, 256>}, {pipeline_mode = #tpu.pipeline_mode<synchronous>, transform_indices = @transform_1, window_bounds = array<i64: 32, 2>}, {pipeline_mode = #tpu.pipeline_mode<synchronous>, transform_indices = @transform_2, window_bounds = array<i64: 1, 2>}, {pipeline_mode = #tpu.pipeline_mode<synchronous>, transform_indices = @transform_3, window_bounds = array<i64: 2, 32>}, {pipeline_mode = #tpu.pipeline_mode<synchronous>, transform_indices = @transform_4, window_bounds = array<i64: 1, 32>}, {transform_indices = @transform_5, window_bounds = array<i64: 1, 32, 256>}]} {
    %c0 = arith.constant 0 : index
    %c0_0 = arith.constant 0 : index
    %c0_1 = arith.constant 0 : index
    %0 = vector.load %arg1[%c0, %c0_0, %c0_1] : memref<1x32x256xf32, #tpu.memory_space<vmem>>, vector<1x32x128xf32>
    %c0_2 = arith.constant 0 : index
    %c0_3 = arith.constant 0 : index
    %c128 = arith.constant 128 : index
    %1 = vector.load %arg1[%c0_2, %c0_3, %c128] : memref<1x32x256xf32, #tpu.memory_space<vmem>>, vector<1x32x128xf32>
    %2 = arith.addf %0, %1 : vector<1x32x128xf32>
    %3 = arith.maximumf %0, %1 : vector<1x32x128xf32>
    %cst = arith.constant dense<0.000000e+00> : vector<1x32xf32>
    %4 = vector.multi_reduction <add>, %2, %cst [2] : vector<1x32x128xf32> to vector<1x32xf32>
    %cst_4 = arith.constant 3.906250e-03 : f32
    %5 = vector.broadcast %cst_4 : f32 to vector<1x32xf32>
    %6 = arith.mulf %4, %5 : vector<1x32xf32>
    %cst_5 = arith.constant dense<0xFF800000> : vector<1x32xf32>
    %7 = vector.multi_reduction <maximumf>, %3, %cst_5 [2] : vector<1x32x128xf32> to vector<1x32xf32>
    %8 = tpu.concatenate %6, %7 in 0 : vector<1x32xf32>, vector<1x32xf32> -> vector<2x32xf32>
    %c0_6 = arith.constant 0 : index
    %c0_7 = arith.constant 0 : index
    %9 = vector.load %arg2[%c0_6, %c0_7] : memref<32x2xf32, #tpu.memory_space<vmem>>, vector<32x2xf32>
    %c0_8 = arith.constant 0 : index
    %c0_9 = arith.constant 0 : index
    %10 = vector.load %arg3[%c0_8, %c0_9] : memref<1x2xf32, #tpu.memory_space<vmem>>, vector<1x2xf32>
    %c0_10 = arith.constant 0 : index
    %c0_11 = arith.constant 0 : index
    %11 = vector.load %arg4[%c0_10, %c0_11] : memref<2x32xf32, #tpu.memory_space<vmem>>, vector<2x32xf32>
    %c0_12 = arith.constant 0 : index
    %c0_13 = arith.constant 0 : index
    %12 = vector.load %arg5[%c0_12, %c0_13] : memref<1x32xf32, #tpu.memory_space<vmem>>, vector<1x32xf32>
    %cst_14 = arith.constant dense<0.000000e+00> : vector<2x2xf32>
    %13 = tpu.matmul %8, %9, %cst_14 {dimension_numbers = #tpu.dot_dimension_numbers<[1], [0], [0], [1], [0, 0, 1, 1], [], []>} : vector<2x32xf32>, vector<32x2xf32>, vector<2x2xf32> -> vector<2x2xf32>
    %14 = vector.broadcast %10 : vector<1x2xf32> to vector<2x2xf32>
    %15 = arith.addf %13, %14 : vector<2x2xf32>
    %cst_15 = arith.constant 0.000000e+00 : f32
    %16 = vector.broadcast %cst_15 : f32 to vector<2x2xf32>
    %17 = arith.maximumf %15, %16 : vector<2x2xf32>
    %18 = vector.extract_strided_slice %17 {offsets = [0, 0], sizes = [1, 2], strides = [1, 1]} : vector<2x2xf32> to vector<1x2xf32>
    %19 = vector.extract_strided_slice %17 {offsets = [1, 0], sizes = [1, 2], strides = [1, 1]} : vector<2x2xf32> to vector<1x2xf32>
    %20 = arith.addf %18, %19 : vector<1x2xf32>
    %cst_16 = arith.constant dense<0.000000e+00> : vector<1x32xf32>
    %21 = tpu.matmul %20, %11, %cst_16 {dimension_numbers = #tpu.dot_dimension_numbers<[1], [0], [0], [1], [0, 0, 1, 1], [], []>} : vector<1x2xf32>, vector<2x32xf32>, vector<1x32xf32> -> vector<1x32xf32>
    %cst_17 = arith.constant 2.000000e+00 : f32
    %22 = vector.broadcast %cst_17 : f32 to vector<1x32xf32>
    %23 = arith.mulf %22, %12 : vector<1x32xf32>
    %24 = arith.addf %21, %23 : vector<1x32xf32>
    %25 = arith.negf %24 : vector<1x32xf32>
    %26 = math.exp %25 : vector<1x32xf32>
    %cst_18 = arith.constant 1.000000e+00 : f32
    %27 = vector.broadcast %cst_18 : f32 to vector<1x32xf32>
    %28 = arith.addf %27, %26 : vector<1x32xf32>
    %29 = arith.divf %27, %28 : vector<1x32xf32>
    %c0_19 = arith.constant 0 : index
    %c0_20 = arith.constant 0 : index
    %c0_21 = arith.constant 0 : index
    %30 = vector.load %arg1[%c0_19, %c0_20, %c0_21] : memref<1x32x256xf32, #tpu.memory_space<vmem>>, vector<1x32x256xf32>
    %31 = vector.shape_cast %29 : vector<1x32xf32> to vector<1x32x1xf32>
    %32 = vector.broadcast %31 : vector<1x32x1xf32> to vector<1x32x256xf32>
    %33 = arith.mulf %30, %32 : vector<1x32x256xf32>
    %c0_22 = arith.constant 0 : index
    %c0_23 = arith.constant 0 : index
    %c0_24 = arith.constant 0 : index
    %34 = vector.load %arg6[%c0_22, %c0_23, %c0_24] : memref<1x32x256xf32, #tpu.memory_space<vmem>>, vector<1x32x256xf32>
    tpu.vector_store %arg6[%c0_22, %c0_23, %c0_24], %33 {strides = array<i32>} : memref<1x32x256xf32, #tpu.memory_space<vmem>>, vector<1x32x256xf32>,
    return
  }
  func.func @transform_0(%arg0: i32) -> (i32, i32, i32) {
    %c0_i32 = arith.constant 0 : i32
    %c0_i32_0 = arith.constant 0 : i32
    %c0_i32_1 = arith.constant 0 : i32
    return %arg0, %c0_i32, %c0_i32_0 : i32, i32, i32
  }
  func.func @transform_1(%arg0: i32) -> (i32, i32) {
    %c0_i32 = arith.constant 0 : i32
    %c0_i32_0 = arith.constant 0 : i32
    %c0_i32_1 = arith.constant 0 : i32
    return %c0_i32, %c0_i32_0 : i32, i32
  }
  func.func @transform_2(%arg0: i32) -> (i32, i32) {
    %c0_i32 = arith.constant 0 : i32
    %c0_i32_0 = arith.constant 0 : i32
    %c0_i32_1 = arith.constant 0 : i32
    return %c0_i32, %c0_i32_0 : i32, i32
  }
  func.func @transform_3(%arg0: i32) -> (i32, i32) {
    %c0_i32 = arith.constant 0 : i32
    %c0_i32_0 = arith.constant 0 : i32
    %c0_i32_1 = arith.constant 0 : i32
    return %c0_i32, %c0_i32_0 : i32, i32
  }
  func.func @transform_4(%arg0: i32) -> (i32, i32) {
    %c0_i32 = arith.constant 0 : i32
    %c0_i32_0 = arith.constant 0 : i32
    %c0_i32_1 = arith.constant 0 : i32
    return %c0_i32, %c0_i32_0 : i32, i32
  }
  func.func @transform_5(%arg0: i32) -> (i32, i32, i32) {
    %c0_i32 = arith.constant 0 : i32
    %c0_i32_0 = arith.constant 0 : i32
    %c0_i32_1 = arith.constant 0 : i32
    return %arg0, %c0_i32, %c0_i32_0 : i32, i32, i32
  }
}

</mosaic_0001>

<llo_original>
// kernel: tpu_custom_call.1
$region0: #{tpu_custom_call.1}
  #allocation0 [shape = 'u32[]', space=smem, size = 0x4, offset = 0x4, fixed_abs, tag = 'smem constant byte address 0x4 - core index']
  #allocation1 [shape = 'u32[144,128]{1,0:T(1,128)}', space=vmem, size = 0x12000, scoped, tag = 'internal scratch']
  %s0 = inlined_call_operand.hbm [shape: f32[2,32,256], index: 0, kind: input, shape index: {}]
  %s1 = inlined_call_operand.vmem [shape: f32[32,2], index: 1, kind: input, shape index: {}]
  %s2 = inlined_call_operand.vmem [shape: f32[1,2], index: 2, kind: input, shape index: {}]
  %s3 = inlined_call_operand.vmem [shape: f32[2,32], index: 3, kind: input, shape index: {}]
  %s4 = inlined_call_operand.vmem [shape: f32[1,32], index: 4, kind: input, shape index: {}]
  %s5 = inlined_call_operand.hbm [shape: f32[2,32,256], index: 5, kind: output, shape index: {}]
  %s6 = sld [smem:[#allocation0]]
  $region57: #{tpu_custom_call.1} parent=0
    _
  %s8 = ssub.s32 1, %s6
  %s9 = scalar_select 0, %s8, %s6
  $region1: #{tpu_custom_call.1} parent=0
    #allocation2 [shape = 'u8[65536]{0}', space=vmem, size = 0x10000, scoped, tag = 'input window, operand 0']
    #allocation3 [shape = 's32[2]{0}', space=sflag, size = 0x8, scoped, tag = 'scoped memory for tpu_custom_call.1']
    #allocation4 [shape = 's32[2]{0}', space=sflag, size = 0x8, scoped, tag = 'scoped memory for tpu_custom_call.1']
    #allocation5 [shape = 'u8[65536]{0}', space=vmem, size = 0x10000, scoped, tag = 'output window, operand 0']
    %10 = vsyncpa [#allocation3], 0
    %s11 = scalar_lea.sflag [#allocation3], 1
    %12 = vsyncpa %s11, 0
    %13 = vsyncpa [#allocation4], 0
    %s14 = scalar_lea.sflag [#allocation4], 1
    %15 = vsyncpa %s14, 0
    loop: start=0, step=1, limit=4
    $region2: #{tpu_custom_call.1} parent=1 // loop_pre_header
      _
    $region3: #{tpu_custom_call.1} parent=1 // loop_header
      %s17 = sphi 0, %s21
      %p18 = scmp.ge.s32.totalorder %s17, 4
      %s27 = sphi 0, %s29
      %s30 = sphi 0, %s27
      %s31 = sphi 0, %s30
      %s47 = sphi 0, %s31
      %s51 = sphi 0, %s51
      %s53 = sphi 0, %s51
      %s54 = sphi 0, %s53
      %s68 = sphi 0, %s54
      %s72 = sphi 0, %s72
      %s74 = sphi 0, %s72
      %s75 = sphi 0, %s74
      %s89 = sphi 0, %s75
      %s93 = sphi 0, %s93
      %s95 = sphi 0, %s93
      %s96 = sphi 0, %s95
      %s110 = sphi 0, %s96
      %s114 = sphi 0, %s114
      %s116 = sphi 0, %s114
      %s117 = sphi 0, %s116
      %s131 = sphi 0, %s117
      %s137 = sphi 0, %s139
      %s140 = sphi 0, %s137
      %s141 = sphi 0, %s140
      %s157 = sphi 0, %s141
    $region4: #{tpu_custom_call.1} parent=1 // loop_header_branch
      %20 = sbr.rel (%p18) target = $region8
    $region5: #{tpu_custom_call.1} parent=1 // loop_body
      %s22 = ssub.s32 %s17, 1
      %s23 = ssub.s32 %s17, 2
      %s24 = sadd.s32 %s17, 1
      %s25 = ssub.s32 %s17, %s24
      %p26 = scmp.eq.s32.totalorder %s25, 0
      %s28 = sadd.s32 %s27, 1
      %s29 = scalar_select %p26, %s27, %s28
      %p32 = pneg %p26
      %p33 = scmp.eq.s32.totalorder %s17, 1
      %p34 = por %p32, %p33
      %p35 = scmp.ne.s32.totalorder %s27, %s30
      %p36 = scmp.eq.s32.totalorder %s17, 0
      %p37 = por %p35, %p36
      %p38 = scmp.ne.s32.totalorder %s27, %s30
      %p39 = scmp.eq.s32.totalorder %s22, 1
      %p40 = por %p38, %p39
      %p41 = scmp.ne.s32.totalorder %s30, %s31
      %p42 = scmp.eq.s32.totalorder %s22, 0
      %p43 = por %p41, %p42
      %p44 = scmp.ne.s32.totalorder %s30, %s31
      %p45 = scmp.eq.s32.totalorder %s23, 1
      %p46 = por %p44, %p45
      %p48 = scmp.ne.s32.totalorder %s31, %s47
      %p49 = scmp.eq.s32.totalorder %s23, 0
      %p50 = por %p48, %p49
      %s52 = sadd.s32 %s51, 1
      %p55 = scmp.eq.s32.totalorder %s17, 1
      %p56 = scmp.ne.s32.totalorder %s51, %s53
      %p57 = scmp.eq.s32.totalorder %s17, 0
      %p58 = por %p56, %p57
      %p59 = scmp.ne.s32.totalorder %s51, %s53
      %p60 = scmp.eq.s32.totalorder %s22, 1
      %p61 = por %p59, %p60
      %p62 = scmp.ne.s32.totalorder %s53, %s54
      %p63 = scmp.eq.s32.totalorder %s22, 0
      %p64 = por %p62, %p63
      %p65 = scmp.ne.s32.totalorder %s53, %s54
      %p66 = scmp.eq.s32.totalorder %s23, 1
      %p67 = por %p65, %p66
      %p69 = scmp.ne.s32.totalorder %s54, %s68
      %p70 = scmp.eq.s32.totalorder %s23, 0
      %p71 = por %p69, %p70
      %s73 = sadd.s32 %s72, 1
      %p76 = scmp.eq.s32.totalorder %s17, 1
      %p77 = scmp.ne.s32.totalorder %s72, %s74
      %p78 = scmp.eq.s32.totalorder %s17, 0
      %p79 = por %p77, %p78
      %p80 = scmp.ne.s32.totalorder %s72, %s74
      %p81 = scmp.eq.s32.totalorder %s22, 1
      %p82 = por %p80, %p81
      %p83 = scmp.ne.s32.totalorder %s74, %s75
      %p84 = scmp.eq.s32.totalorder %s22, 0
      %p85 = por %p83, %p84
      %p86 = scmp.ne.s32.totalorder %s74, %s75
      %p87 = scmp.eq.s32.totalorder %s23, 1
      %p88 = por %p86, %p87
      %p90 = scmp.ne.s32.totalorder %s75, %s89
      %p91 = scmp.eq.s32.totalorder %s23, 0
      %p92 = por %p90, %p91
      %s94 = sadd.s32 %s93, 1
      %p97 = scmp.eq.s32.totalorder %s17, 1
      %p98 = scmp.ne.s32.totalorder %s93, %s95
      %p99 = scmp.eq.s32.totalorder %s17, 0
      %p100 = por %p98, %p99
      %p101 = scmp.ne.s32.totalorder %s93, %s95
      %p102 = scmp.eq.s32.totalorder %s22, 1
      %p103 = por %p101, %p102
      %p104 = scmp.ne.s32.totalorder %s95, %s96
      %p105 = scmp.eq.s32.totalorder %s22, 0
      %p106 = por %p104, %p105
      %p107 = scmp.ne.s32.totalorder %s95, %s96
      %p108 = scmp.eq.s32.totalorder %s23, 1
      %p109 = por %p107, %p108
      %p111 = scmp.ne.s32.totalorder %s96, %s110
      %p112 = scmp.eq.s32.totalorder %s23, 0
      %p113 = por %p111, %p112
      %s115 = sadd.s32 %s114, 1
      %p118 = scmp.eq.s32.totalorder %s17, 1
      %p119 = scmp.ne.s32.totalorder %s114, %s116
      %p120 = scmp.eq.s32.totalorder %s17, 0
      %p121 = por %p119, %p120
      %p122 = scmp.ne.s32.totalorder %s114, %s116
      %p123 = scmp.eq.s32.totalorder %s22, 1
      %p124 = por %p122, %p123
      %p125 = scmp.ne.s32.totalorder %s116, %s117
      %p126 = scmp.eq.s32.totalorder %s22, 0
      %p127 = por %p125, %p126
      %p128 = scmp.ne.s32.totalorder %s116, %s117
      %p129 = scmp.eq.s32.totalorder %s23, 1
      %p130 = por %p128, %p129
      %p132 = scmp.ne.s32.totalorder %s117, %s131
      %p133 = scmp.eq.s32.totalorder %s23, 0
      %p134 = por %p132, %p133
      %s135 = ssub.s32 %s17, %s24
      %p136 = scmp.eq.s32.totalorder %s135, 0
      %s138 = sadd.s32 %s137, 1
      %s139 = scalar_select %p136, %s137, %s138
      %p142 = pneg %p136
      %p143 = scmp.eq.s32.totalorder %s17, 1
      %p144 = por %p142, %p143
      %p145 = scmp.ne.s32.totalorder %s137, %s140
      %p146 = scmp.eq.s32.totalorder %s17, 0
      %p147 = por %p145, %p146
      %p148 = scmp.ne.s32.totalorder %s137, %s140
      %p149 = scmp.eq.s32.totalorder %s22, 1
      %p150 = por %p148, %p149
      %p151 = scmp.ne.s32.totalorder %s140, %s141
      %p152 = scmp.eq.s32.totalorder %s22, 0
      %p153 = por %p151, %p152
      %p154 = scmp.ne.s32.totalorder %s140, %s141
      %p155 = scmp.eq.s32.totalorder %s23, 1
      %p156 = por %p154, %p155
      %p158 = scmp.ne.s32.totalorder %s141, %s157
      %p159 = scmp.eq.s32.totalorder %s23, 0
      %p160 = por %p158, %p159
      %p161 = scmp.le.s32.totalorder 1, %s17
      %p162 = scmp.lt.s32.totalorder %s17, 3
      %p163 = pnand %p161, %p162
      %p164 = pneg %p163
      // Predicated region
      $region9: #{tpu_custom_call.1} parent=5 // pred_check
        _
      $region10: #{tpu_custom_call.1} parent=5 // pred_check_branch
        %166 = sbr.rel (%p163) target = $region12
      $region11: #{tpu_custom_call.1} parent=5 // pred_region
        %s167 = ssub.s32 %s17, 1
        // Predicated region
        $region13: #{tpu_custom_call.1} parent=11 // pred_check
          %p168 = pneg %p64
        $region14: #{tpu_custom_call.1} parent=11 // pred_check_branch
          %170 = sbr.rel (%p168) target = $region16
        $region15: #{tpu_custom_call.1} parent=11 // pred_region
          _
        $region16: #{tpu_custom_call.1} parent=11 // pred_fallthru
          _
        // Predicated region
        $region17: #{tpu_custom_call.1} parent=11 // pred_check
          %p171 = pneg %p85
        $region18: #{tpu_custom_call.1} parent=11 // pred_check_branch
          %173 = sbr.rel (%p171) target = $region20
        $region19: #{tpu_custom_call.1} parent=11 // pred_region
          _
        $region20: #{tpu_custom_call.1} parent=11 // pred_fallthru
          _
        // Predicated region
        $region21: #{tpu_custom_call.1} parent=11 // pred_check
          %p174 = pneg %p106
        $region22: #{tpu_custom_call.1} parent=11 // pred_check_branch
          %176 = sbr.rel (%p174) target = $region24
        $region23: #{tpu_custom_call.1} parent=11 // pred_region
          _
        $region24: #{tpu_custom_call.1} parent=11 // pred_fallthru
          _
        // Predicated region
        $region25: #{tpu_custom_call.1} parent=11 // pred_check
          %p177 = pneg %p127
        $region26: #{tpu_custom_call.1} parent=11 // pred_check_branch
          %179 = sbr.rel (%p177) target = $region28
        $region27: #{tpu_custom_call.1} parent=11 // pred_region
          _
        $region28: #{tpu_custom_call.1} parent=11 // pred_fallthru
          _
      $region12: #{tpu_custom_call.1} parent=5 // pred_fallthru
        _
      %p180 = scmp.lt.s32.totalorder %s17, 2
      // Predicated region
      $region29: #{tpu_custom_call.1} parent=5 // pred_check
        %p181 = pneg %p180
      $region30: #{tpu_custom_call.1} parent=5 // pred_check_branch
        %183 = sbr.rel (%p181) target = $region32
      $region31: #{tpu_custom_call.1} parent=5 // pred_region
        // Predicated region
        $region33: #{tpu_custom_call.1} parent=31 // pred_check
          %p184 = pneg %p37
        $region34: #{tpu_custom_call.1} parent=31 // pred_check_branch
          %186 = sbr.rel (%p184) target = $region36
        $region35: #{tpu_custom_call.1} parent=31 // pred_region
          %s187 = sand.u32 %s27, 1
          %s188 = scalar_lea.sflag [#allocation3], %s187
          %s189 = sand.u32 %s27, 1
          %s190 = smul.addr %s189, 64
          %s191 = scalar_lea.vmem [#allocation2], %s190
          %s193 = ssub.s32 1024, 1024
          %194 = vsyncadd %s188, %s193
          %s195 = smul.addr %s17, 8
          %s196 = smul.addr %s195, 128
          %s197 = scalar_lea.hbm %s0, %s196
          %s198 = sshll.u32 %s191, 4
          %s199 = int_to_ptr.vmem [resolvable:$true] %s198
          %204 = dma.hbm_to_vmem [thread:$0]  %s197, 1024, %s199, %s188, 256, 256, 16
        $region36: #{tpu_custom_call.1} parent=31 // pred_fallthru
          _
      $region32: #{tpu_custom_call.1} parent=5 // pred_fallthru
        _
      %p205 = scmp.le.s32.totalorder 1, %s17
      %p206 = scmp.lt.s32.totalorder %s17, 3
      %p207 = pnand %p205, %p206
      %p208 = pneg %p207
      // Predicated region
      $region37: #{tpu_custom_call.1} parent=5 // pred_check
        _
      $region38: #{tpu_custom_call.1} parent=5 // pred_check_branch
        %210 = sbr.rel (%p207) target = $region40
      $region39: #{tpu_custom_call.1} parent=5 // pred_region
        %s211 = ssub.s32 %s17, 1
        %s212 = sand.u32 %s30, 1
        %s213 = scalar_lea.sflag [#allocation3], %s212
        %s214 = sand.u32 %s30, 1
        %s215 = smul.addr %s214, 64
        %s216 = scalar_lea.vmem [#allocation2], %s215
        // Predicated region
        $region41: #{tpu_custom_call.1} parent=39 // pred_check
          %p217 = pneg %p43
        $region42: #{tpu_custom_call.1} parent=39 // pred_check_branch
          %219 = sbr.rel (%p217) target = $region44
        $region43: #{tpu_custom_call.1} parent=39 // pred_region
          %220 = dma.done %s213, 1024
        $region44: #{tpu_custom_call.1} parent=39 // pred_fallthru
          _
        %s221 = sand.u32 %s30, 1
        %s222 = scalar_lea.sflag [#allocation3], %s221
        %s223 = sand.u32 %s30, 1
        %s224 = smul.addr %s223, 64
        %s225 = scalar_lea.vmem [#allocation2], %s224
        %p226 = pneg %p43
        %p227 = pneg %p40
        %p228 = pneg %p64
        %p229 = pneg %p61
        %p230 = pneg %p85
        %p231 = pneg %p82
        %p232 = pneg %p106
        %p233 = pneg %p103
        %p234 = pneg %p127
        %p235 = pneg %p124
        %p236 = pneg %p153
        %p237 = pneg %p150
        %s238 = sand.u32 %s140, 1
        %s239 = scalar_lea.sflag [#allocation4], %s238
        %s240 = sand.u32 %s140, 1
        %s241 = smul.addr %s240, 64
        %s242 = scalar_lea.vmem [#allocation5], %s241
        %v243 = vld [vmem:[%s216] sm:$0xff]
        %v244 = vld [vmem:[%s216 + $0x10] sm:$0xff]
        %v245 = vld [vmem:[%s216 + $0x20] sm:$0xff]
        %v246 = vld [vmem:[%s216 + $0x30] sm:$0xff]
        %v247 = vld [vmem:[%s216 + $0x8] sm:$0xff]
        %v248 = vld [vmem:[%s216 + $0x18] sm:$0xff]
        %v249 = vld [vmem:[%s216 + $0x28] sm:$0xff]
        %v250 = vld [vmem:[%s216 + $0x38] sm:$0xff]
        %v251 = vadd.f32 %v243, %v247
        %v252 = vadd.f32 %v244, %v248
        %v253 = vadd.f32 %v245, %v249
        %v254 = vadd.f32 %v246, %v250
        %v255 = vmax.f32 %v243, %v247
        %v256 = vmax.f32 %v244, %v248
        %v257 = vmax.f32 %v245, %v249
        %v258 = vmax.f32 %v246, %v250
        %259 = vadd.xlane.f32.xlu0 %v251
        %v260 = vpop.xlane.xlu0 %259
        %261 = vadd.xlane.f32.xlu0 %v252
        %v262 = vpop.xlane.xlu0 %261
        %263 = vadd.xlane.f32.xlu0 %v253
        %v264 = vpop.xlane.xlu0 %263
        %265 = vadd.xlane.f32.xlu0 %v254
        %v266 = vpop.xlane.xlu0 %265
        %v267 = vmul.f32 %v260, 0.00390625
        %v268 = vmul.f32 %v262, 0.00390625
        %v269 = vmul.f32 %v264, 0.00390625
        %v270 = vmul.f32 %v266, 0.00390625
        %271 = vmax.xlane.f32.xlu0 %v255
        %v272 = vpop.xlane.xlu0 %271
        %273 = vmax.xlane.f32.xlu0 %v256
        %v274 = vpop.xlane.xlu0 %273
        %275 = vmax.xlane.f32.xlu0 %v257
        %v276 = vpop.xlane.xlu0 %275
        %277 = vmax.xlane.f32.xlu0 %v258
        %v278 = vpop.xlane.xlu0 %277
        %v283 = vlaneseq
        %v284 = vand.u32 %v283, 127
        %v285 = vlaneseq
        %v286 = vshrl.u32 %v285, 7
        %v287 = vsub.s32 %v284, %v286
        %v288 = vrot.slane %v267, %v287
        %v289 = vadd.s32 %v284, 4294967288
        %v290 = vlaneseq
        %v291 = vshrl.u32 %v290, 7
        %v292 = vsub.s32 %v289, %v291
        %v293 = vrot.slane %v268, %v292
        %vm294 = vcmask 130112
        %v295 = vsel %vm294, %v293, %v288
        %v296 = vadd.s32 %v284, 4294967280
        %v297 = vlaneseq
        %v298 = vshrl.u32 %v297, 7
        %v299 = vsub.s32 %v296, %v298
        %v300 = vrot.slane %v269, %v299
        %vm301 = vcmask 195712
        %v302 = vsel %vm301, %v300, %v295
        %v303 = vadd.s32 %v284, 4294967272
        %v304 = vlaneseq
        %v305 = vshrl.u32 %v304, 7
        %v306 = vsub.s32 %v303, %v305
        %v307 = vrot.slane %v270, %v306
        %vm308 = vcmask 261312
        %v309 = vsel %vm308, %v307, %v302
        %v315 = vlaneseq
        %v316 = vshrl.u32 %v315, 7
        %v317 = vsub.s32 %v284, %v316
        %v318 = vrot.slane %v272, %v317
        %v319 = vlaneseq
        %v320 = vshrl.u32 %v319, 7
        %v321 = vsub.s32 %v289, %v320
        %v322 = vrot.slane %v274, %v321
        %v323 = vsel %vm294, %v322, %v318
        %v324 = vlaneseq
        %v325 = vshrl.u32 %v324, 7
        %v326 = vsub.s32 %v296, %v325
        %v327 = vrot.slane %v276, %v326
        %v328 = vsel %vm301, %v327, %v323
        %v329 = vlaneseq
        %v330 = vshrl.u32 %v329, 7
        %v331 = vsub.s32 %v303, %v330
        %v332 = vrot.slane %v278, %v331
        %v333 = vsel %vm308, %v332, %v328
        %vm335 = vcmask 1040384
        %v336 = vsel %vm335, %v309, %v333
        %v337 = vld [vmem:[%s1] sm:$0xff]
        %v338 = vld [vmem:[%s1 + $0x8] sm:$0xff]
        %v339 = vld [vmem:[%s1 + $0x10] sm:$0xff]
        %v340 = vld [vmem:[%s1 + $0x18] sm:$0xff]
        %v341 = vld [vmem:[%s2] sm:$0x1]
        %v342 = vld [vmem:[%s3] sm:$0x3]
        %v343 = vld [vmem:[%s4] sm:$0x1]
        %v345 = vlaneseq
        %v346 = vshrl.u32 %v345, 7
        %v347 = vsub.s32 0, %v346
        %v348 = vrot.slane %v341, %v347
        %vm350 = vcmask 261120
        %v352 = vsel %vm350, %v336, 0
        %354 = vmatprep.subr.mxu0 0.0
        %355 = vmatpush1.msra.mxu0 0.0
        %356 = vmatprep.subr.mxu0 0.0
        %357 = vmatpush1.msra.mxu0 0.0
        %358 = vmatprep.subr.mxu0 0.0
        %359 = vmatpush1.msra.mxu0 0.0
        %360 = vmatprep.subr.mxu0 0.0
        %361 = vmatpush1.msra.mxu0 0.0
        %362 = vmatprep.subr.mxu0 0.0
        %363 = vmatpush1.msra.mxu0 0.0
        %364 = vmatprep.subr.mxu0 0.0
        %365 = vmatpush1.msra.mxu0 0.0
        %366 = vmatprep.subr.mxu0 0.0
        %367 = vmatpush1.msra.mxu0 0.0
        %368 = vmatprep.subr.mxu0 0.0
        %369 = vmatpush1.msra.mxu0 0.0
        %370 = vmatprep.subr.mxu0 0.0
        %371 = vmatpush1.msra.mxu0 0.0
        %372 = vmatprep.subr.mxu0 0.0
        %373 = vmatpush1.msra.mxu0 0.0
        %374 = vmatprep.subr.mxu0 0.0
        %375 = vmatpush1.msra.mxu0 0.0
        %376 = vmatprep.subr.mxu0 0.0
        %377 = vmatpush1.msra.mxu0 0.0
        %378 = vmatprep.subr.mxu0 0.0
        %379 = vmatpush1.msra.mxu0 %v340
        %380 = vmatprep.subr.mxu0 0.0
        %381 = vmatpush1.msra.mxu0 %v339
        %382 = vmatprep.subr.mxu0 0.0
        %383 = vmatpush1.msra.mxu0 %v338
        %384 = vmatprep.subr.mxu0 0.0
        %385 = vmatpush1.msra.mxu0 %v337
        %386 = vmatprep.subr.mxu0 0.0
        %387 = vmatpush2.msra.mxu0 0.0
        %388 = vmatprep.subr.mxu0 0.0
        %389 = vmatpush2.msra.mxu0 0.0
        %390 = vmatprep.subr.mxu0 0.0
        %391 = vmatpush2.msra.mxu0 0.0
        %392 = vmatprep.subr.mxu0 0.0
        %393 = vmatpush2.msra.mxu0 0.0
        %394 = vmatprep.subr.mxu0 0.0
        %395 = vmatpush2.msra.mxu0 0.0
        %396 = vmatprep.subr.mxu0 0.0
        %397 = vmatpush2.msra.mxu0 0.0
        %398 = vmatprep.subr.mxu0 0.0
        %399 = vmatpush2.msra.mxu0 0.0
        %400 = vmatprep.subr.mxu0 0.0
        %401 = vmatpush2.msra.mxu0 0.0
        %402 = vmatprep.subr.mxu0 0.0
        %403 = vmatpush2.msra.mxu0 0.0
        %404 = vmatprep.subr.mxu0 0.0
        %405 = vmatpush2.msra.mxu0 0.0
        %406 = vmatprep.subr.mxu0 0.0
        %407 = vmatpush2.msra.mxu0 0.0
        %408 = vmatprep.subr.mxu0 0.0
        %409 = vmatpush2.msra.mxu0 0.0
        %410 = vmatprep.subr.mxu0 0.0
        %411 = vmatpush2.msra.mxu0 0.0
        %412 = vmatprep.subr.mxu0 0.0
        %413 = vmatpush2.msra.mxu0 0.0
        %414 = vmatprep.subr.mxu0 0.0
        %415 = vmatpush2.msra.mxu0 0.0
        %416 = vmatprep.subr.mxu0 0.0
        %417 = vmatpush2.msra.mxu0 0.0
        %418 = vmatprep.mubr.f32.mxu0 0.0
        %419 = vmatmul.mubr.f32.gmra.mxu0 %v352
        %v420 = vpop.f32.mrf.mxu0
        %v421 = vadd.f32 %v348, %v420
        %v422 = vpop.f32.mrf.mxu0
        %423 = vdwg.mxu0
        %v424 = vmax.f32 %v421, 0.0
        %v426 = vrot.slane %v424, 1
        %v428 = vadd.f32 %v424, %v426
        %v429 = vmul.f32 %v343, 2.0
        %vm430 = vcmask 15360
        %v432 = vsel %vm430, %v428, 0
        %vm434 = vcmask 1041408
        %v436 = vsel %vm434, %v342, 0
        %438 = vmatprep.subr.mxu0 0.0
        %439 = vmatpush1.msra.mxu0 0.0
        %440 = vmatprep.subr.mxu0 0.0
        %441 = vmatpush1.msra.mxu0 0.0
        %442 = vmatprep.subr.mxu0 0.0
        %443 = vmatpush1.msra.mxu0 0.0
        %444 = vmatprep.subr.mxu0 0.0
        %445 = vmatpush1.msra.mxu0 0.0
        %446 = vmatprep.subr.mxu0 0.0
        %447 = vmatpush1.msra.mxu0 0.0
        %448 = vmatprep.subr.mxu0 0.0
        %449 = vmatpush1.msra.mxu0 0.0
        %450 = vmatprep.subr.mxu0 0.0
        %451 = vmatpush1.msra.mxu0 0.0
        %452 = vmatprep.subr.mxu0 0.0
        %453 = vmatpush1.msra.mxu0 0.0
        %454 = vmatprep.subr.mxu0 0.0
        %455 = vmatpush1.msra.mxu0 0.0
        %456 = vmatprep.subr.mxu0 0.0
        %457 = vmatpush1.msra.mxu0 0.0
        %458 = vmatprep.subr.mxu0 0.0
        %459 = vmatpush1.msra.mxu0 0.0
        %460 = vmatprep.subr.mxu0 0.0
        %461 = vmatpush1.msra.mxu0 0.0
        %462 = vmatprep.subr.mxu0 0.0
        %463 = vmatpush1.msra.mxu0 0.0
        %464 = vmatprep.subr.mxu0 0.0
        %465 = vmatpush1.msra.mxu0 0.0
        %466 = vmatprep.subr.mxu0 0.0
        %467 = vmatpush1.msra.mxu0 0.0
        %468 = vmatprep.subr.mxu0 0.0
        %469 = vmatpush1.msra.mxu0 %v436
        %470 = vmatprep.subr.mxu0 0.0
        %471 = vmatpush2.msra.mxu0 0.0
        %472 = vmatprep.subr.mxu0 0.0
        %473 = vmatpush2.msra.mxu0 0.0
        %474 = vmatprep.subr.mxu0 0.0
        %475 = vmatpush2.msra.mxu0 0.0
        %476 = vmatprep.subr.mxu0 0.0
        %477 = vmatpush2.msra.mxu0 0.0
        %478 = vmatprep.subr.mxu0 0.0
        %479 = vmatpush2.msra.mxu0 0.0
        %480 = vmatprep.subr.mxu0 0.0
        %481 = vmatpush2.msra.mxu0 0.0
        %482 = vmatprep.subr.mxu0 0.0
        %483 = vmatpush2.msra.mxu0 0.0
        %484 = vmatprep.subr.mxu0 0.0
        %485 = vmatpush2.msra.mxu0 0.0
        %486 = vmatprep.subr.mxu0 0.0
        %487 = vmatpush2.msra.mxu0 0.0
        %488 = vmatprep.subr.mxu0 0.0
        %489 = vmatpush2.msra.mxu0 0.0
        %490 = vmatprep.subr.mxu0 0.0
        %491 = vmatpush2.msra.mxu0 0.0
        %492 = vmatprep.subr.mxu0 0.0
        %493 = vmatpush2.msra.mxu0 0.0
        %494 = vmatprep.subr.mxu0 0.0
        %495 = vmatpush2.msra.mxu0 0.0
        %496 = vmatprep.subr.mxu0 0.0
        %497 = vmatpush2.msra.mxu0 0.0
        %498 = vmatprep.subr.mxu0 0.0
        %499 = vmatpush2.msra.mxu0 0.0
        %500 = vmatprep.subr.mxu0 0.0
        %501 = vmatpush2.msra.mxu0 0.0
        %502 = vmatprep.mubr.f32.mxu0 0.0
        %503 = vmatmul.mubr.f32.gmra.mxu0 %v432
        %v504 = vpop.f32.mrf.mxu0
        %v505 = vadd.f32 %v429, %v504
        %v506 = vpop.f32.mrf.mxu0
        %507 = vdwg.mxu0
        %v508 = vxor.u32 %v505, 2147483648
        %v509 = vmul.f32 %v508, 1.442695
        %v510 = vpow.pop %v509
        %v511 = vadd.f32 %v510, 1.0
        %v512 = vrcp.pop %v511
        %v513 = vmul.f32 1.0, %v512
        %v514 = vld [vmem:[%s216] sm:$0xff]
        %v515 = vld [vmem:[%s216 + $0x10] sm:$0xff]
        %v516 = vld [vmem:[%s216 + $0x20] sm:$0xff]
        %v517 = vld [vmem:[%s216 + $0x30] sm:$0xff]
        %v518 = vlaneseq
        %v519 = vshrl.u32 %v518, 7
        %v520 = vsub.s32 0, %v519
        %v521 = vrot.slane %v513, %v520
        %523 = vbcast.lane.b32.xlu0 %v521, 256
        %v524 = vpop.permute.xlu0 %523
        %s526 = sor.u32 256, 8
        %527 = vbcast.lane.b32.xlu0 %v521, %s526
        %v528 = vpop.permute.xlu0 %527
        %s530 = sor.u32 256, 16
        %531 = vbcast.lane.b32.xlu0 %v521, %s530
        %v532 = vpop.permute.xlu0 %531
        %s534 = sor.u32 256, 24
        %535 = vbcast.lane.b32.xlu0 %v521, %s534
        %v536 = vpop.permute.xlu0 %535
        %v537 = vmul.f32 %v514, %v524
        %v538 = vmul.f32 %v247, %v524
        %v539 = vmul.f32 %v515, %v528
        %v540 = vmul.f32 %v248, %v528
        %v541 = vmul.f32 %v516, %v532
        %v542 = vmul.f32 %v249, %v532
        %v543 = vmul.f32 %v517, %v536
        %v544 = vmul.f32 %v250, %v536
        %545 = vst [vmem:[%s242] sm:$0xff] %v537
        %546 = vst [vmem:[%s242 + $0x8] sm:$0xff] %v538
        %547 = vst [vmem:[%s242 + $0x10] sm:$0xff] %v539
        %548 = vst [vmem:[%s242 + $0x18] sm:$0xff] %v540
        %549 = vst [vmem:[%s242 + $0x20] sm:$0xff] %v541
        %550 = vst [vmem:[%s242 + $0x28] sm:$0xff] %v542
        %551 = vst [vmem:[%s242 + $0x30] sm:$0xff] %v543
        %552 = vst [vmem:[%s242 + $0x38] sm:$0xff] %v544
        %s553 = sand.u32 %s140, 1
        %s554 = scalar_lea.sflag [#allocation4], %s553
        %s555 = sand.u32 %s140, 1
        %s556 = smul.addr %s555, 64
        %s557 = scalar_lea.vmem [#allocation5], %s556
        // Predicated region
        $region45: #{tpu_custom_call.1} parent=39 // pred_check
          %p558 = pneg %p150
        $region46: #{tpu_custom_call.1} parent=39 // pred_check_branch
          %560 = sbr.rel (%p558) target = $region48
        $region47: #{tpu_custom_call.1} parent=39 // pred_region
          %s562 = ssub.s32 1024, 1024
          %563 = vsyncadd %s554, %s562
          %s564 = smul.addr %s22, 8
          %s565 = smul.addr %s564, 128
          %s566 = scalar_lea.hbm %s5, %s565
          %s567 = sshll.u32 %s557, 4
          %s568 = int_to_ptr.vmem [resolvable:$true] %s567
          %573 = dma.vmem_to_hbm [thread:$0]  %s568, 1024, %s566, %s554, 256, 256, 16
        $region48: #{tpu_custom_call.1} parent=39 // pred_fallthru
          _
      $region40: #{tpu_custom_call.1} parent=5 // pred_fallthru
        _
      %p574 = scmp.le.s32.totalorder 2, %s17
      // Predicated region
      $region49: #{tpu_custom_call.1} parent=5 // pred_check
        %p575 = pneg %p574
      $region50: #{tpu_custom_call.1} parent=5 // pred_check_branch
        %577 = sbr.rel (%p575) target = $region52
      $region51: #{tpu_custom_call.1} parent=5 // pred_region
        %s578 = ssub.s32 %s17, 2
        // Predicated region
        $region53: #{tpu_custom_call.1} parent=51 // pred_check
          %p579 = pneg %p156
        $region54: #{tpu_custom_call.1} parent=51 // pred_check_branch
          %581 = sbr.rel (%p579) target = $region56
        $region55: #{tpu_custom_call.1} parent=51 // pred_region
          %s582 = sand.u32 %s141, 1
          %s583 = scalar_lea.sflag [#allocation4], %s582
          %s584 = sand.u32 %s141, 1
          %s585 = smul.addr %s584, 64
          %s586 = scalar_lea.vmem [#allocation5], %s585
          %587 = dma.done %s583, 1024
        $region56: #{tpu_custom_call.1} parent=51 // pred_fallthru
          _
      $region52: #{tpu_custom_call.1} parent=5 // pred_fallthru
        _
    $region6: #{tpu_custom_call.1} parent=1 // loop_footer
      %s21 = sadd.s32 1, %s17
    $region7: #{tpu_custom_call.1} parent=1 // loop_footer_branch
      %16 = sbr.rel target = $region3
    $region8: #{tpu_custom_call.1} parent=1 // loop_exit
      _
    %588 = vsyncpa [#allocation3], 1
    %s589 = scalar_lea.sflag [#allocation3], 1
    %590 = vsyncpa %s589, 1
    %591 = vsyncpa [#allocation4], 1
    %s592 = scalar_lea.sflag [#allocation4], 1
    %593 = vsyncpa %s592, 1

</llo_original>
